<compile_context>
chip_gen: v6e
topology: v6e:2x2x1
jax: 0.10.0
libtpu: 0.0.40
codegen_flags: <defaults>
</compile_context>

<pallas_src>
import numpy as np
import jax
import jax.numpy as jnp
from jax.experimental import pallas as pl
from jax.experimental.pallas import tpu as pltpu  # noqa: F401  (TPU backend)

# ---- hyperparameters of SIAEEigCoeffReg(f_scale, f_exp, s_scale, s_exp, total_scale, scale, ...)
F_SCALE = 0.5
F_EXP = 2.0
S_SCALE = 0.25
S_EXP = 2.0
TOTAL_SCALE = 1.0
SCALE = 1.0          # EigCoeffReg.scale (non-zero -> coeff_loss branch is taken)
# train_data = None, schedule = None, pred_steps = 10 (unused in forward)

B, D, N = 8, 16, 32           # batch, input dim, latent (Koopman) dim
P_ROWS = D + N + 3            # packed slab rows: W_enc | |V| | target | mask | fs-const
COEFF_MUL = SCALE * TOTAL_SCALE / N   # folds scale, total_scale and 1/N
MASK_TOL = 1e-12              # tolerance for the eig_fs == 0 mask


def _siae_eig_coeff_reg_kernel(x_ref, p_ref, out_ref):
    x = x_ref[...]                               # (B, D) f32 — input batch
    wenc = p_ref[0:D, :]                         # (D, N)   synthetic encoder weight
    absv = p_ref[D:D + N, :]                     # (N, N)   |eigenvectors(dynamics)|
    target = p_ref[D + N:D + N + 1, :]           # (1, N)   pre-normalized target spectrum
    mask = p_ref[D + N + 1:D + N + 2, :]         # (1, N)   (eig_fs != 0) as f32
    extra = p_ref[D + N + 2:D + N + 3, :]        # (1, N)   (f_loss+s_loss)*total_scale / N per lane

    # --- model.detailed_forward(X): synthetic encoder producing latent zk ---
    # bf16 MXU operands (native on v5e/v6e/v7x), f32 accumulation.
    zk = jnp.tanh(jnp.dot(x.astype(jnp.bfloat16), wenc.astype(jnp.bfloat16),
                          preferred_element_type=jnp.float32))            # (B, N) f32

    # --- EigCoeffReg.calc_loss (train_data is None branch) ---
    proj = jnp.dot(zk.astype(jnp.bfloat16), absv.astype(jnp.bfloat16),
                   preferred_element_type=jnp.float32)                    # (B, N) f32

    # batch mean of (zk @ |V|)^2 as an XLU sublane reduction (no extra MXU trip)
    ec = jnp.mean(proj * proj, axis=0, keepdims=True)                     # (1, N)

    # exact normalization of the eigen coefficients (target pre-normalized on host)
    ec_norm = ec / jnp.sum(ec, axis=-1, keepdims=True)                    # (1, N)
    err = (target - ec_norm) * mask                                       # (1, N)

    # coeff_loss = sum(err^2) * scale*total_scale/N ; (f_loss+s_loss) folded in via `extra`
    out_ref[...] = jnp.sum(err * err * COEFF_MUL + extra, axis=-1, keepdims=True)


def siae_eig_coeff_reg(x, packed_params):
    """Returns the (1, 1) regularization loss."""
    flops = 2 * B * D * N + 2 * B * N * N + 3 * B * N + 8 * N
    transcendentals = B * N + 1                   # tanh + reciprocal of the normalizer
    bytes_accessed = (x.size + packed_params.size + 1) * 4
    return pl.pallas_call(
        _siae_eig_coeff_reg_kernel,
        out_shape=jax.ShapeDtypeStruct((1, 1), jnp.float32),
        in_specs=[pl.BlockSpec((B, D), lambda: (0, 0)),
                  pl.BlockSpec((P_ROWS, N), lambda: (0, 0))],
        out_specs=pl.BlockSpec((1, 1), lambda: (0, 0)),
        cost_estimate=pl.CostEstimate(flops=flops,
                                      transcendentals=transcendentals,
                                      bytes_accessed=bytes_accessed),
    )(x, packed_params)


def build_packed_params(w_enc, w_dyn):
    """Host-side setup: eigendecomposition of the fixed dynamics matrix and
    everything derivable from it alone."""
    # TODO(synk): torch.linalg.eig has no Pallas/TPU equivalent; the complex
    # eigendecomposition of the (fixed) dynamics weight is done on host in
    # NumPy at parameter-setup time (as is everything derived only from it).
    eigvals, eigvecs = np.linalg.eig(np.asarray(w_dyn, np.float64))
    log_ev = np.log(eigvals)                                  # complex log
    abs_vecs = np.abs(eigvecs).astype(np.float32)             # (N, N)
    eig_fs = np.abs(log_ev.imag / np.pi)                      # (N,)

    target = (1.0 + eig_fs) ** -2
    target = (target / target.sum()).astype(np.float32)       # pre-normalized

    # torch zeroes error where eig_fs == 0; use a small tolerance so lanes
    # whose eigenvalues carry ~1e-17 imaginary eig noise are still masked.
    mask = (eig_fs > MASK_TOL).astype(np.float32)

    # SIAEEigCoeffReg.calc_loss: eigenvalue frequency / stability losses
    s_loss = np.mean(np.abs(np.maximum(log_ev.real, 0.0) ** S_EXP)) * S_SCALE
    f_loss = np.mean(np.abs(log_ev.imag ** F_EXP)) * F_SCALE
    fs_const = np.float32((f_loss + s_loss) * TOTAL_SCALE)

    packed = np.zeros((P_ROWS, N), np.float32)
    packed[0:D] = np.asarray(w_enc, np.float32)               # encoder weight
    packed[D:D + N] = abs_vecs                                # |eigvecs|
    packed[D + N] = target
    packed[D + N + 1] = mask
    packed[D + N + 2, :] = fs_const / N                       # folded into lane-sum
    return packed


def _reference(x, w_enc, w_dyn):
    # pure-NumPy (f32/f64) reference of the same forward
    eigvals, eigvecs = np.linalg.eig(w_dyn.astype(np.float64))
    log_ev = np.log(eigvals)
    eig_fs = np.abs(log_ev.imag / np.pi)

    zk = np.tanh(x @ w_enc)
    ec = np.mean(np.abs(zk @ np.abs(eigvecs)) ** 2, axis=0)
    target = (1.0 + eig_fs) ** -2
    ec = ec / ec.sum()
    target = target / target.sum()
    err = target - ec
    err[eig_fs <= MASK_TOL] = 0.0
    coeff_loss = np.sum(err ** 2) / err.shape[0] * SCALE

    s_loss = np.mean(np.abs(np.maximum(log_ev.real, 0.0) ** S_EXP)) * S_SCALE
    f_loss = np.mean(np.abs(log_ev.imag ** F_EXP)) * F_SCALE
    return (coeff_loss + f_loss + s_loss) * TOTAL_SCALE


if __name__ == "__main__":
    key = jax.random.PRNGKey(0)
    kx, kenc, kdyn = jax.random.split(key, 3)

    # deterministic "model" parameters + inputs
    X = jax.random.normal(kx, (B, D), dtype=jnp.float32)
    W_enc = 0.3 * jax.random.normal(kenc, (D, N), dtype=jnp.float32)
    W_dyn = 0.5 * jnp.eye(N, dtype=jnp.float32) + \
        0.1 * jax.random.normal(kdyn, (N, N), dtype=jnp.float32)

    packed = jnp.asarray(build_packed_params(np.asarray(W_enc), np.asarray(W_dyn)))

    loss = siae_eig_coeff_reg(X, packed)          # (1, 1)
    loss = jax.block_until_ready(loss)

    ref = _reference(np.asarray(X, np.float32), np.asarray(W_enc, np.float32),
                     np.asarray(W_dyn, np.float32))
    np.testing.assert_allclose(np.asarray(loss)[0, 0], ref, rtol=5e-2, atol=1e-6)

    print("KERNEL_OK")
</pallas_src>

<mosaic_0001>
module attributes {stable_mosaic.version = 11 : i64} {
  func.func @_siae_eig_coeff_reg_kernel(%arg0: memref<8x16xf32, #tpu.memory_space<vmem>>, %arg1: memref<51x32xf32, #tpu.memory_space<vmem>>, %arg2: memref<1x1xf32, #tpu.memory_space<vmem>>) attributes {dimension_semantics = [], scalar_prefetch = 0 : i64, scratch_operands = 0 : i64, tpu.core_type = #tpu.core_type<tc>} {
    %c0 = arith.constant 0 : index
    %c0_0 = arith.constant 0 : index
    %0 = vector.load %arg0[%c0, %c0_0] : memref<8x16xf32, #tpu.memory_space<vmem>>, vector<8x16xf32>
    %c0_1 = arith.constant 0 : index
    %c0_2 = arith.constant 0 : index
    %1 = vector.load %arg1[%c0_1, %c0_2] : memref<51x32xf32, #tpu.memory_space<vmem>>, vector<16x32xf32>
    %c16 = arith.constant 16 : index
    %c0_3 = arith.constant 0 : index
    %2 = vector.load %arg1[%c16, %c0_3] : memref<51x32xf32, #tpu.memory_space<vmem>>, vector<32x32xf32>
    %c48 = arith.constant 48 : index
    %c0_4 = arith.constant 0 : index
    %3 = vector.load %arg1[%c48, %c0_4] : memref<51x32xf32, #tpu.memory_space<vmem>>, vector<1x32xf32>
    %c49 = arith.constant 49 : index
    %c0_5 = arith.constant 0 : index
    %4 = vector.load %arg1[%c49, %c0_5] : memref<51x32xf32, #tpu.memory_space<vmem>>, vector<1x32xf32>
    %c50 = arith.constant 50 : index
    %c0_6 = arith.constant 0 : index
    %5 = vector.load %arg1[%c50, %c0_6] : memref<51x32xf32, #tpu.memory_space<vmem>>, vector<1x32xf32>
    %6 = arith.truncf %0 : vector<8x16xf32> to vector<8x16xbf16>
    %7 = arith.truncf %1 : vector<16x32xf32> to vector<16x32xbf16>
    %cst = arith.constant dense<0.000000e+00> : vector<8x32xf32>
    %8 = tpu.matmul %6, %7, %cst {dimension_numbers = #tpu.dot_dimension_numbers<[1], [0], [0], [1], [0, 0, 1, 1], [], []>} : vector<8x16xbf16>, vector<16x32xbf16>, vector<8x32xf32> -> vector<8x32xf32>
    %9 = math.tanh %8 : vector<8x32xf32>
    %10 = arith.truncf %9 : vector<8x32xf32> to vector<8x32xbf16>
    %11 = arith.truncf %2 : vector<32x32xf32> to vector<32x32xbf16>
    %cst_7 = arith.constant dense<0.000000e+00> : vector<8x32xf32>
    %12 = tpu.matmul %10, %11, %cst_7 {dimension_numbers = #tpu.dot_dimension_numbers<[1], [0], [0], [1], [0, 0, 1, 1], [], []>} : vector<8x32xbf16>, vector<32x32xbf16>, vector<8x32xf32> -> vector<8x32xf32>
    %13 = arith.mulf %12, %12 : vector<8x32xf32>
    %cst_8 = arith.constant dense<0.000000e+00> : vector<32xf32>
    %14 = vector.multi_reduction <add>, %13, %cst_8 [0] : vector<8x32xf32> to vector<32xf32>
    %15 = vector.shape_cast %14 : vector<32xf32> to vector<1x32xf32>
    %cst_9 = arith.constant 8.000000e+00 : f32
    %16 = vector.broadcast %cst_9 : f32 to vector<1x32xf32>
    %17 = arith.divf %15, %16 : vector<1x32xf32>
    %cst_10 = arith.constant dense<0.000000e+00> : vector<1xf32>
    %18 = vector.multi_reduction <add>, %17, %cst_10 [1] : vector<1x32xf32> to vector<1xf32>
    %19 = vector.shape_cast %18 : vector<1xf32> to vector<1x1xf32>
    %20 = vector.broadcast %19 : vector<1x1xf32> to vector<1x32xf32>
    %21 = arith.divf %17, %20 : vector<1x32xf32>
    %22 = arith.subf %3, %21 : vector<1x32xf32>
    %23 = arith.mulf %22, %4 : vector<1x32xf32>
    %24 = arith.mulf %23, %23 : vector<1x32xf32>
    %cst_11 = arith.constant 3.125000e-02 : f32
    %25 = vector.broadcast %cst_11 : f32 to vector<1x32xf32>
    %26 = arith.mulf %24, %25 : vector<1x32xf32>
    %27 = arith.addf %26, %5 : vector<1x32xf32>
    %cst_12 = arith.constant dense<0.000000e+00> : vector<1xf32>
    %28 = vector.multi_reduction <add>, %27, %cst_12 [1] : vector<1x32xf32> to vector<1xf32>
    %29 = vector.shape_cast %28 : vector<1xf32> to vector<1x1xf32>
    %c0_13 = arith.constant 0 : index
    %c0_14 = arith.constant 0 : index
    %30 = vector.load %arg2[%c0_13, %c0_14] : memref<1x1xf32, #tpu.memory_space<vmem>>, vector<1x1xf32>
    tpu.vector_store %arg2[%c0_13, %c0_14], %29 {strides = array<i32>} : memref<1x1xf32, #tpu.memory_space<vmem>>, vector<1x1xf32>,
    return
  }
}

</mosaic_0001>

<llo_original>
// kernel: tpu_custom_call.1
$region0: #{tpu_custom_call.1}
  #allocation0 [shape = 'u32[]', space=smem, size = 0x4, offset = 0x4, fixed_abs, tag = 'smem constant byte address 0x4 - core index']
  #allocation1 [shape = 'u32[144,128]{1,0:T(1,128)}', space=vmem, size = 0x12000, scoped, tag = 'internal scratch']
  %s0 = inlined_call_operand.vmem [shape: f32[8,16], index: 0, kind: input, shape index: {}]
  %s1 = inlined_call_operand.vmem [shape: f32[51,32], index: 1, kind: input, shape index: {}]
  %s2 = inlined_call_operand.hbm [shape: f32[1,1], index: 2, kind: output, shape index: {}]
  %s3 = sld [smem:[#allocation0]]
  $region18: #{tpu_custom_call.1} parent=0
    _
  %s5 = ssub.s32 1, %s3
  %s6 = scalar_select 0, %s5, %s3
  $region1: #{tpu_custom_call.1} parent=0
    #allocation2 [shape = 'u8[512]{0}', space=vmem, size = 0x400, scoped, tag = 'output window, operand 0, single buffered']
    #allocation3 [shape = 's32[1]{0}', space=sflag, size = 0x4, scoped, tag = 'scoped memory for tpu_custom_call.1']
    %7 = vsyncpa [#allocation3], 0
    // Predicated region
    $region2: #{tpu_custom_call.1} parent=1 // pred_check
      _
    $region3: #{tpu_custom_call.1} parent=1 // pred_check_branch
      %9 = sbr.rel (0) target = $region5
    $region4: #{tpu_custom_call.1} parent=1 // pred_region
      _
    $region5: #{tpu_custom_call.1} parent=1 // pred_fallthru
      _
    // Predicated region
    $region6: #{tpu_custom_call.1} parent=1 // pred_check
      _
    $region7: #{tpu_custom_call.1} parent=1 // pred_check_branch
      %11 = sbr.rel (0) target = $region9
    $region8: #{tpu_custom_call.1} parent=1 // pred_region
      _
    $region9: #{tpu_custom_call.1} parent=1 // pred_fallthru
      _
    %v13 = vld [vmem:[%s0] sm:$0xff]
    %v14 = vld [vmem:[%s1] sm:$0xff]
    %v15 = vld [vmem:[%s1 + $0x8] sm:$0xff]
    %v16 = vld [vmem:[%s1 + $0x10] sm:$0xff]
    %v17 = vld [vmem:[%s1 + $0x18] sm:$0xff]
    %v18 = vld [vmem:[%s1 + $0x20] sm:$0xff]
    %v19 = vld [vmem:[%s1 + $0x28] sm:$0xff]
    %v20 = vld [vmem:[%s1 + $0x30] sm:$0x1]
    %v21 = vld [vmem:[%s1 + $0x31] sm:$0x1]
    %v22 = vld [vmem:[%s1 + $0x32] sm:$0x1]
    %v23 = vpack.c.bf16 %v13, %v13
    %v24 = vpack.c.bf16 %v15, %v14
    %vm25 = vcmask 130048
    %v27 = vsel %vm25, %v23, 0
    %29 = vmatprep.subr.bf16.mxu0 0
    %30 = vmatpush1.bf16.msra.mxu0 0
    %31 = vmatprep.subr.bf16.mxu0 0
    %32 = vmatpush1.bf16.msra.mxu0 0
    %33 = vmatprep.subr.bf16.mxu0 0
    %34 = vmatpush1.bf16.msra.mxu0 0
    %35 = vmatprep.subr.bf16.mxu0 0
    %36 = vmatpush1.bf16.msra.mxu0 0
    %37 = vmatprep.subr.bf16.mxu0 0
    %38 = vmatpush1.bf16.msra.mxu0 0
    %39 = vmatprep.subr.bf16.mxu0 0
    %40 = vmatpush1.bf16.msra.mxu0 0
    %41 = vmatprep.subr.bf16.mxu0 0
    %42 = vmatpush1.bf16.msra.mxu0 0
    %43 = vmatprep.subr.bf16.mxu0 0
    %44 = vmatpush1.bf16.msra.mxu0 %v24
    %45 = vmatprep.subr.bf16.mxu0 0
    %46 = vmatpush2.bf16.msra.mxu0 0
    %47 = vmatprep.subr.bf16.mxu0 0
    %48 = vmatpush2.bf16.msra.mxu0 0
    %49 = vmatprep.subr.bf16.mxu0 0
    %50 = vmatpush2.bf16.msra.mxu0 0
    %51 = vmatprep.subr.bf16.mxu0 0
    %52 = vmatpush2.bf16.msra.mxu0 0
    %53 = vmatprep.subr.bf16.mxu0 0
    %54 = vmatpush2.bf16.msra.mxu0 0
    %55 = vmatprep.subr.bf16.mxu0 0
    %56 = vmatpush2.bf16.msra.mxu0 0
    %57 = vmatprep.subr.bf16.mxu0 0
    %58 = vmatpush2.bf16.msra.mxu0 0
    %59 = vmatprep.subr.bf16.mxu0 0
    %60 = vmatpush2.bf16.msra.mxu0 0
    %61 = vmatprep.mubr.bf16.mxu0 0
    %62 = vmatmul.mubr.bf16.gmra.mxu0 %v27
    %v63 = vpop.f32.mrf.mxu0
    %v64 = vadd.f32 0.0, %v63
    %v65 = vpop.f32.mrf.mxu0
    %v66 = vpop.f32.mrf.mxu0
    %v67 = vpop.f32.mrf.mxu0
    %68 = vdwg.mxu0
    %v69 = vtanh.pop %v64
    %v70 = vpack.c.bf16 %v69, %v69
    %v71 = vpack.c.bf16 %v17, %v16
    %v72 = vpack.c.bf16 %v19, %v18
    %vm73 = vcmask 261120
    %v75 = vsel %vm73, %v70, 0
    %77 = vmatprep.subr.bf16.mxu0 0
    %78 = vmatpush1.bf16.msra.mxu0 0
    %79 = vmatprep.subr.bf16.mxu0 0
    %80 = vmatpush1.bf16.msra.mxu0 0
    %81 = vmatprep.subr.bf16.mxu0 0
    %82 = vmatpush1.bf16.msra.mxu0 0
    %83 = vmatprep.subr.bf16.mxu0 0
    %84 = vmatpush1.bf16.msra.mxu0 0
    %85 = vmatprep.subr.bf16.mxu0 0
    %86 = vmatpush1.bf16.msra.mxu0 0
    %87 = vmatprep.subr.bf16.mxu0 0
    %88 = vmatpush1.bf16.msra.mxu0 0
    %89 = vmatprep.subr.bf16.mxu0 0
    %90 = vmatpush1.bf16.msra.mxu0 %v72
    %91 = vmatprep.subr.bf16.mxu0 0
    %92 = vmatpush1.bf16.msra.mxu0 %v71
    %93 = vmatprep.subr.bf16.mxu0 0
    %94 = vmatpush2.bf16.msra.mxu0 0
    %95 = vmatprep.subr.bf16.mxu0 0
    %96 = vmatpush2.bf16.msra.mxu0 0
    %97 = vmatprep.subr.bf16.mxu0 0
    %98 = vmatpush2.bf16.msra.mxu0 0
    %99 = vmatprep.subr.bf16.mxu0 0
    %100 = vmatpush2.bf16.msra.mxu0 0
    %101 = vmatprep.subr.bf16.mxu0 0
    %102 = vmatpush2.bf16.msra.mxu0 0
    %103 = vmatprep.subr.bf16.mxu0 0
    %104 = vmatpush2.bf16.msra.mxu0 0
    %105 = vmatprep.subr.bf16.mxu0 0
    %106 = vmatpush2.bf16.msra.mxu0 0
    %107 = vmatprep.subr.bf16.mxu0 0
    %108 = vmatpush2.bf16.msra.mxu0 0
    %109 = vmatprep.mubr.bf16.mxu0 0
    %110 = vmatmul.mubr.bf16.gmra.mxu0 %v75
    %v111 = vpop.f32.mrf.mxu0
    %v112 = vadd.f32 0.0, %v111
    %v113 = vpop.f32.mrf.mxu0
    %v114 = vpop.f32.mrf.mxu0
    %v115 = vpop.f32.mrf.mxu0
    %116 = vdwg.mxu0
    %v117 = vmul.f32 %v112, %v112
    %v118 = vsel %vm73, %v117, 0.0
    %v119 = vrot.slane %v118, 4
    %v120 = vadd.f32 %v118, %v119
    %v121 = vrot.slane %v120, 2
    %v122 = vadd.f32 %v120, %v121
    %v123 = vrot.slane %v122, 1
    %v124 = vadd.f32 %v122, %v123
    %v125 = vrcp.pop 8.0
    %v126 = vmul.f32 %v124, %v125
    %v127 = vsel %vm73, %v126, 0.0
    %128 = vadd.xlane.f32.xlu0 %v127
    %v129 = vpop.xlane.xlu0 %128
    %v130 = vrcp.pop %v129
    %v131 = vmul.f32 %v126, %v130
    %v132 = vsub.f32 %v20, %v131
    %v133 = vmul.f32 %v132, %v21
    %v134 = vmul.f32 %v133, %v133
    %v135 = vmul.f32 %v134, 0.03125
    %v136 = vadd.f32 %v135, %v22
    %vm137 = vcmask 253952
    %v138 = vsel %vm137, %v136, 0.0
    %139 = vadd.xlane.f32.xlu0 %v138
    %v140 = vpop.xlane.xlu0 %139
    %vm141 = vcmask 0
    %142 = vst.msk [vmem:[#allocation2] sm:$0x1] %vm141, %v140
    // Predicated region
    $region10: #{tpu_custom_call.1} parent=1 // pred_check
      _
    $region11: #{tpu_custom_call.1} parent=1 // pred_check_branch
      %144 = sbr.rel (0) target = $region13
    $region12: #{tpu_custom_call.1} parent=1 // pred_region
      %s146 = ssub.s32 16, 16
      %147 = vsyncadd [#allocation3], %s146
      %s149 = sshll.u32 [#allocation2], 4
      %s150 = int_to_ptr.vmem [resolvable:$true] %s149
      %152 = dma.vmem_to_hbm [thread:$0]  %s150, 16, %s2, [#allocation3]
    $region13: #{tpu_custom_call.1} parent=1 // pred_fallthru
      _
    // Predicated region
    $region14: #{tpu_custom_call.1} parent=1 // pred_check
      _
    $region15: #{tpu_custom_call.1} parent=1 // pred_check_branch
      %154 = sbr.rel (0) target = $region17
    $region16: #{tpu_custom_call.1} parent=1 // pred_region
      %155 = dma.done [#allocation3], 16
    $region17: #{tpu_custom_call.1} parent=1 // pred_fallthru
      _
    %156 = vsyncpa [#allocation3], 1

</llo_original>
